<compile_context>
chip_gen: v7x
topology: tpu7x:2x2x1
jax: 0.10.0
libtpu: 0.0.40
codegen_flags: <defaults>
</compile_context>

<pallas_src>
import jax
import jax.numpy as jnp
from jax import lax
from jax.experimental import pallas as pl
from jax.experimental.pallas import tpu as pltpu


def _rope_kernel(x_ref, cos_ref, sin_ref, o_ref):
    """x_ref/o_ref: (TS, H, D) tile; cos_ref/sin_ref: (TS, 1, D) f32 tables."""
    x = x_ref[...].astype(jnp.float32)            # (TS, H, D)
    d = x.shape[-1]

    cos = cos_ref[...]                            # (TS, 1, D) — broadcast over H
    sin = sin_ref[...]

    # pair_swap(x): even lane takes its odd neighbour, odd lane its even one.
    parity = lax.broadcasted_iota(jnp.int32, x.shape, 2) % 2
    x_swap = jnp.where(parity == 0,
                       pltpu.roll(x, d - 1, 2),   # y[i] = x[i + 1]
                       pltpu.roll(x, 1, 2))       # y[i] = x[i - 1]

    # out[2k]   = a*cos_k - b*sin_k ; out[2k+1] = a*sin_k + b*cos_k
    o_ref[...] = (x * cos + x_swap * sin).astype(o_ref.dtype)


def _rope_tables(seq_len: int, head_dim: int, theta_base: float):
    """Interleaved-layout cos/sin tables, shape (S, 1, D), f32."""
    # theta_k = base ** (-2k / head_dim), exactly as in the PyTorch module.
    inv_freq = 1.0 / (theta_base
                      ** (jnp.arange(0, head_dim, 2, dtype=jnp.float32)
                          / head_dim))                       # (D/2,)
    m = jnp.arange(seq_len, dtype=jnp.float32)
    freqs = jnp.outer(m, inv_freq)                           # (S, D/2)
    cos = jnp.cos(freqs)
    sin = jnp.sin(freqs)
    # cos_rep[s]    = [ c0, c0,  c1, c1, ...]
    # sin_signed[s] = [-s0, s0, -s1, s1, ...]
    cos_rep = jnp.repeat(cos, 2, axis=-1)
    sin_signed = jnp.stack([-sin, sin], axis=-1).reshape(seq_len, head_dim)
    return (cos_rep.reshape(seq_len, 1, head_dim),
            sin_signed.reshape(seq_len, 1, head_dim))


def rotary_positional_embeddings(x: jax.Array,
                                 theta_base: float = 10000.0,
                                 seq_tile: int = 256) -> jax.Array:
    """RoPE over x of shape (batch, seq, heads, head_dim); head_dim even."""
    B, S, H, D = x.shape
    assert D % 2 == 0, "head_dim must be divisible by 2"

    cos_t, sin_t = _rope_tables(S, D, theta_base)

    ts = min(S, seq_tile)
    grid = (pl.cdiv(S, ts), B)   # seq tiles outer, batch inner (table reuse)

    x_spec = pl.BlockSpec((None, ts, H, D), lambda s, b: (b, s, 0, 0))
    t_spec = pl.BlockSpec((ts, 1, D), lambda s, b: (s, 0, 0))

    return pl.pallas_call(
        _rope_kernel,
        out_shape=jax.ShapeDtypeStruct((B, S, H, D), x.dtype),
        grid=grid,
        in_specs=[x_spec, t_spec, t_spec],
        out_specs=x_spec,
        compiler_params=pltpu.CompilerParams(
            dimension_semantics=("parallel", "parallel")),
    )(x, cos_t, sin_t)


def _rope_reference(x: jax.Array, theta_base: float = 10000.0):
    """Pure-JAX mirror of the PyTorch forward for validation."""
    B, S, H, D = x.shape
    inv_freq = 1.0 / (theta_base ** (jnp.arange(0, D, 2, dtype=jnp.float32) / D))
    m = jnp.arange(S, dtype=jnp.float32)
    freqs = jnp.outer(m, inv_freq)                      # (S, D/2)
    cos = jnp.cos(freqs)[None, :, None, :]
    sin = jnp.sin(freqs)[None, :, None, :]
    xr = x.astype(jnp.float32).reshape(B, S, H, D // 2, 2)
    a, b = xr[..., 0], xr[..., 1]
    out = jnp.stack([a * cos - b * sin, a * sin + b * cos], axis=-1)
    return out.reshape(B, S, H, D).astype(x.dtype)


if __name__ == "__main__":
    # Shapes consistent with the module's (batch, seq, heads, head_dim) input.
    B, S, H, D = 2, 8, 2, 32
    x = jax.random.normal(jax.random.PRNGKey(0), (B, S, H, D), dtype=jnp.float32)

    out = jax.block_until_ready(rotary_positional_embeddings(x))
    ref = _rope_reference(x)
    assert out.shape == x.shape and out.dtype == x.dtype
    assert jnp.allclose(out, ref, atol=1e-5, rtol=1e-5), "f32 mismatch vs reference"

    # Partial final seq tile (S % seq_tile != 0) exercises padded grid steps.
    x2 = jax.random.normal(jax.random.PRNGKey(1), (1, 40, 4, 64), dtype=jnp.float32)
    out2 = jax.block_until_ready(rotary_positional_embeddings(x2, seq_tile=16))
    ref2 = _rope_reference(x2)
    assert jnp.allclose(out2, ref2, atol=1e-5, rtol=1e-5), "partial-tile mismatch"

    # bf16 I/O with f32 in-kernel math.
    x3 = jax.random.normal(jax.random.PRNGKey(2), (2, 16, 2, 32), dtype=jnp.bfloat16)
    out3 = jax.block_until_ready(rotary_positional_embeddings(x3))
    ref3 = _rope_reference(x3)
    assert out3.dtype == jnp.bfloat16
    assert jnp.allclose(out3.astype(jnp.float32), ref3.astype(jnp.float32),
                        atol=2e-2, rtol=2e-2), "bf16 mismatch vs reference"

    print("KERNEL_OK")
</pallas_src>

<mosaic_0001>
module attributes {stable_mosaic.version = 11 : i64} {
  func.func @_rope_kernel(%arg0: i32, %arg1: i32, %arg2: memref<1x8x2x32xf32, #tpu.memory_space<vmem>>, %arg3: memref<8x1x32xf32, #tpu.memory_space<vmem>>, %arg4: memref<8x1x32xf32, #tpu.memory_space<vmem>>, %arg5: memref<1x8x2x32xf32, #tpu.memory_space<vmem>>) attributes {dimension_semantics = [#tpu.dimension_semantics<parallel>, #tpu.dimension_semantics<parallel>], iteration_bounds = array<i64: 1, 2>, scalar_prefetch = 0 : i64, scratch_operands = 0 : i64, tpu.core_type = #tpu.core_type<tc>, window_params = [{transform_indices = @transform_0, window_bounds = array<i64: 1, 8, 2, 32>}, {transform_indices = @transform_1, window_bounds = array<i64: 8, 1, 32>}, {transform_indices = @transform_2, window_bounds = array<i64: 8, 1, 32>}, {transform_indices = @transform_3, window_bounds = array<i64: 1, 8, 2, 32>}]} {
    %c0 = arith.constant 0 : index
    %c0_0 = arith.constant 0 : index
    %c0_1 = arith.constant 0 : index
    %c0_2 = arith.constant 0 : index
    %0 = vector.load %arg2[%c0, %c0_0, %c0_1, %c0_2] : memref<1x8x2x32xf32, #tpu.memory_space<vmem>>, vector<1x8x2x32xf32>
    %1 = vector.shape_cast %0 : vector<1x8x2x32xf32> to vector<8x2x32xf32>
    %c0_3 = arith.constant 0 : index
    %c0_4 = arith.constant 0 : index
    %c0_5 = arith.constant 0 : index
    %2 = vector.load %arg3[%c0_3, %c0_4, %c0_5] : memref<8x1x32xf32, #tpu.memory_space<vmem>>, vector<8x1x32xf32>
    %c0_6 = arith.constant 0 : index
    %c0_7 = arith.constant 0 : index
    %c0_8 = arith.constant 0 : index
    %3 = vector.load %arg4[%c0_6, %c0_7, %c0_8] : memref<8x1x32xf32, #tpu.memory_space<vmem>>, vector<8x1x32xf32>
    %4 = tpu.iota {dimensions = array<i32: 2>} : vector<8x2x32xi32>
    %c2_i32 = arith.constant 2 : i32
    %c0_i32 = arith.constant 0 : i32
    %5 = arith.cmpi eq, %c2_i32, %c0_i32 : i32
    %c1_i32 = arith.constant 1 : i32
    %6 = arith.select %5, %c1_i32, %c2_i32 : i32
    %7 = vector.broadcast %6 : i32 to vector<8x2x32xi32>
    %8 = arith.remsi %4, %7 : vector<8x2x32xi32>
    %c0_i32_9 = arith.constant 0 : i32
    %9 = vector.broadcast %c0_i32_9 : i32 to vector<8x2x32xi32>
    %10 = arith.cmpi ne, %8, %9 : vector<8x2x32xi32>
    %c0_i32_10 = arith.constant 0 : i32
    %11 = vector.broadcast %c0_i32_10 : i32 to vector<8x2x32xi32>
    %12 = arith.cmpi slt, %8, %11 : vector<8x2x32xi32>
    %c0_i32_11 = arith.constant 0 : i32
    %13 = arith.cmpi slt, %6, %c0_i32_11 : i32
    %14 = vector.broadcast %13 : i1 to vector<8x2x32xi1>
    %15 = vector.broadcast %14 : vector<8x2x32xi1> to vector<8x2x32xi1>
    %16 = arith.xori %12, %15 : vector<8x2x32xi1>
    %17 = arith.andi %16, %10 : vector<8x2x32xi1>
    %18 = vector.broadcast %6 : i32 to vector<8x2x32xi32>
    %19 = arith.addi %8, %18 : vector<8x2x32xi32>
    %20 = arith.select %17, %19, %8 : vector<8x2x32xi1>, vector<8x2x32xi32>
    %c0_i32_12 = arith.constant 0 : i32
    %21 = vector.broadcast %c0_i32_12 : i32 to vector<8x2x32xi32>
    %22 = arith.cmpi eq, %20, %21 : vector<8x2x32xi32>
    %c31_i32 = arith.constant 31 : i32
    %23 = tpu.dynamic_rotate %1 by %c31_i32 dim 2 : vector<8x2x32xf32>, i32 -> vector<8x2x32xf32>
    %c1_i32_13 = arith.constant 1 : i32
    %24 = tpu.dynamic_rotate %1 by %c1_i32_13 dim 2 : vector<8x2x32xf32>, i32 -> vector<8x2x32xf32>
    %25 = arith.select %22, %23, %24 : vector<8x2x32xi1>, vector<8x2x32xf32>
    %26 = vector.broadcast %2 : vector<8x1x32xf32> to vector<8x2x32xf32>
    %27 = arith.mulf %1, %26 : vector<8x2x32xf32>
    %28 = vector.broadcast %3 : vector<8x1x32xf32> to vector<8x2x32xf32>
    %29 = arith.mulf %25, %28 : vector<8x2x32xf32>
    %30 = arith.addf %27, %29 : vector<8x2x32xf32>
    %c0_14 = arith.constant 0 : index
    %c0_15 = arith.constant 0 : index
    %c0_16 = arith.constant 0 : index
    %c0_17 = arith.constant 0 : index
    %31 = vector.load %arg5[%c0_14, %c0_15, %c0_16, %c0_17] : memref<1x8x2x32xf32, #tpu.memory_space<vmem>>, vector<1x8x2x32xf32>
    %32 = vector.shape_cast %31 : vector<1x8x2x32xf32> to vector<8x2x32xf32>
    %33 = vector.shape_cast %30 : vector<8x2x32xf32> to vector<1x8x2x32xf32>
    tpu.vector_store %arg5[%c0_14, %c0_15, %c0_16, %c0_17], %33 {strides = array<i32>} : memref<1x8x2x32xf32, #tpu.memory_space<vmem>>, vector<1x8x2x32xf32>,
    return
  }
  func.func @transform_0(%arg0: i32, %arg1: i32) -> (i32, i32, i32, i32) {
    %c0_i32 = arith.constant 0 : i32
    %c0_i32_0 = arith.constant 0 : i32
    %c0_i32_1 = arith.constant 0 : i32
    return %arg1, %arg0, %c0_i32, %c0_i32_0 : i32, i32, i32, i32
  }
  func.func @transform_1(%arg0: i32, %arg1: i32) -> (i32, i32, i32) {
    %c0_i32 = arith.constant 0 : i32
    %c0_i32_0 = arith.constant 0 : i32
    %c0_i32_1 = arith.constant 0 : i32
    return %arg0, %c0_i32, %c0_i32_0 : i32, i32, i32
  }
  func.func @transform_2(%arg0: i32, %arg1: i32) -> (i32, i32, i32) {
    %c0_i32 = arith.constant 0 : i32
    %c0_i32_0 = arith.constant 0 : i32
    %c0_i32_1 = arith.constant 0 : i32
    return %arg0, %c0_i32, %c0_i32_0 : i32, i32, i32
  }
  func.func @transform_3(%arg0: i32, %arg1: i32) -> (i32, i32, i32, i32) {
    %c0_i32 = arith.constant 0 : i32
    %c0_i32_0 = arith.constant 0 : i32
    %c0_i32_1 = arith.constant 0 : i32
    return %arg1, %arg0, %c0_i32, %c0_i32_0 : i32, i32, i32, i32
  }
}

</mosaic_0001>

<llo_original>
// kernel: tpu_custom_call.1
$region0: #{tpu_custom_call.1}
  #allocation0 [shape = 'u32[]', space=smem, size = 0x4, offset = 0x4, fixed_abs, tag = 'smem constant byte address 0x4 - core index']
  #allocation1 [shape = 'u32[144,128]{1,0:T(1,128)}', space=vmem, size = 0x12000, scoped, tag = 'internal scratch']
  %s0 = inlined_call_operand.hbm [shape: f32[2,8,2,32], index: 0, kind: input, shape index: {}]
  %s1 = inlined_call_operand.hbm [shape: f32[8,1,32], index: 1, kind: input, shape index: {}]
  %s2 = inlined_call_operand.hbm [shape: f32[8,1,32], index: 2, kind: input, shape index: {}]
  %s3 = inlined_call_operand.hbm [shape: f32[2,8,2,32], index: 3, kind: output, shape index: {}]
  %s4 = sld [smem:[#allocation0]]
  $region57: #{tpu_custom_call.1} parent=0
    _
  %s6 = ssub.s32 1, %s4
  %s7 = scalar_select 0, %s6, %s4
  $region1: #{tpu_custom_call.1} parent=0
    #allocation2 [shape = 'u8[16384]{0}', space=vmem, size = 0x4000, scoped, tag = 'input window, operand 0']
    #allocation3 [shape = 's32[2]{0}', space=sflag, size = 0x8, scoped, tag = 'scoped memory for tpu_custom_call.1']
    #allocation4 [shape = 's32[2]{0}', space=sflag, size = 0x8, scoped, tag = 'scoped memory for tpu_custom_call.1']
    #allocation5 [shape = 'u8[4096]{0}', space=vmem, size = 0x1000, scoped, tag = 'input window, operand 1, single buffered']
    #allocation6 [shape = 's32[1]{0}', space=sflag, size = 0x4, scoped, tag = 'scoped memory for tpu_custom_call.1']
    #allocation7 [shape = 'u8[4096]{0}', space=vmem, size = 0x1000, scoped, tag = 'input window, operand 2, single buffered']
    #allocation8 [shape = 'u8[16384]{0}', space=vmem, size = 0x4000, scoped, tag = 'output window, operand 0']
    %8 = vsyncpa [#allocation3], 0
    %s9 = scalar_lea.sflag [#allocation3], 1
    %10 = vsyncpa %s9, 0
    %11 = vsyncpa [#allocation6], 0
    %12 = vsyncpa [#allocation4], 0
    %s13 = scalar_lea.sflag [#allocation4], 1
    %14 = vsyncpa %s13, 0
    loop: start=0, step=1, limit=4
    $region2: #{tpu_custom_call.1} parent=1 // loop_pre_header
      _
    $region3: #{tpu_custom_call.1} parent=1 // loop_header
      %s16 = sphi 0, %s20
      %p17 = scmp.ge.s32.totalorder %s16, 4
      %s23 = sphi 0, %s35
      %s24 = sphi 0, %s31
      %s25 = sphi 0, %s23
      %s26 = sphi 0, %s24
      %s27 = sphi 0, %s25
      %s28 = sphi 0, %s26
      %s40 = sphi 0, %s42
      %s43 = sphi 0, %s40
      %s44 = sphi 0, %s43
      %s60 = sphi 0, %s44
      %s66 = sphi 0, %s68
      %s69 = sphi 0, %s66
      %s70 = sphi 0, %s69
      %s86 = sphi 0, %s70
      %s92 = sphi 0, %s94
      %s95 = sphi 0, %s92
      %s96 = sphi 0, %s95
      %s112 = sphi 0, %s96
      %s120 = sphi 0, %s122
      %s123 = sphi 0, %s120
      %s124 = sphi 0, %s123
      %s140 = sphi 0, %s124
    $region4: #{tpu_custom_call.1} parent=1 // loop_header_branch
      %19 = sbr.rel (%p17) target = $region8
    $region5: #{tpu_custom_call.1} parent=1 // loop_body
      %s21 = ssub.s32 %s16, 1
      %s22 = ssub.s32 %s16, 2
      %s29 = sadd.s32 1, %s24
      %p30 = scmp.ge.s32.totalorder %s29, 2
      %s31 = scalar_select %p30, 0, %s29
      %s32 = sadd.s32 1, %s23
      %s33 = scalar_select %p30, %s32, %s23
      %p34 = scmp.ge.s32.totalorder %s33, 1
      %s35 = scalar_select %p34, 0, %s33
      %s36 = ssub.s32 %s24, %s31
      %s37 = ssub.s32 %s23, %s35
      %s38 = sor.u32 %s36, %s37
      %p39 = scmp.eq.s32.totalorder %s38, 0
      %s41 = sadd.s32 %s40, 1
      %s42 = scalar_select %p39, %s40, %s41
      %p45 = pneg %p39
      %p46 = scmp.eq.s32.totalorder %s16, 1
      %p47 = por %p45, %p46
      %p48 = scmp.ne.s32.totalorder %s40, %s43
      %p49 = scmp.eq.s32.totalorder %s16, 0
      %p50 = por %p48, %p49
      %p51 = scmp.ne.s32.totalorder %s40, %s43
      %p52 = scmp.eq.s32.totalorder %s21, 1
      %p53 = por %p51, %p52
      %p54 = scmp.ne.s32.totalorder %s43, %s44
      %p55 = scmp.eq.s32.totalorder %s21, 0
      %p56 = por %p54, %p55
      %p57 = scmp.ne.s32.totalorder %s43, %s44
      %p58 = scmp.eq.s32.totalorder %s22, 1
      %p59 = por %p57, %p58
      %p61 = scmp.ne.s32.totalorder %s44, %s60
      %p62 = scmp.eq.s32.totalorder %s22, 0
      %p63 = por %p61, %p62
      %s64 = ssub.s32 %s23, %s35
      %p65 = scmp.eq.s32.totalorder %s64, 0
      %s67 = sadd.s32 %s66, 1
      %s68 = scalar_select %p65, %s66, %s67
      %p71 = pneg %p65
      %p72 = scmp.eq.s32.totalorder %s16, 1
      %p73 = por %p71, %p72
      %p74 = scmp.ne.s32.totalorder %s66, %s69
      %p75 = scmp.eq.s32.totalorder %s16, 0
      %p76 = por %p74, %p75
      %p77 = scmp.ne.s32.totalorder %s66, %s69
      %p78 = scmp.eq.s32.totalorder %s21, 1
      %p79 = por %p77, %p78
      %p80 = scmp.ne.s32.totalorder %s69, %s70
      %p81 = scmp.eq.s32.totalorder %s21, 0
      %p82 = por %p80, %p81
      %p83 = scmp.ne.s32.totalorder %s69, %s70
      %p84 = scmp.eq.s32.totalorder %s22, 1
      %p85 = por %p83, %p84
      %p87 = scmp.ne.s32.totalorder %s70, %s86
      %p88 = scmp.eq.s32.totalorder %s22, 0
      %p89 = por %p87, %p88
      %s90 = ssub.s32 %s23, %s35
      %p91 = scmp.eq.s32.totalorder %s90, 0
      %s93 = sadd.s32 %s92, 1
      %s94 = scalar_select %p91, %s92, %s93
      %p97 = pneg %p91
      %p98 = scmp.eq.s32.totalorder %s16, 1
      %p99 = por %p97, %p98
      %p100 = scmp.ne.s32.totalorder %s92, %s95
      %p101 = scmp.eq.s32.totalorder %s16, 0
      %p102 = por %p100, %p101
      %p103 = scmp.ne.s32.totalorder %s92, %s95
      %p104 = scmp.eq.s32.totalorder %s21, 1
      %p105 = por %p103, %p104
      %p106 = scmp.ne.s32.totalorder %s95, %s96
      %p107 = scmp.eq.s32.totalorder %s21, 0
      %p108 = por %p106, %p107
      %p109 = scmp.ne.s32.totalorder %s95, %s96
      %p110 = scmp.eq.s32.totalorder %s22, 1
      %p111 = por %p109, %p110
      %p113 = scmp.ne.s32.totalorder %s96, %s112
      %p114 = scmp.eq.s32.totalorder %s22, 0
      %p115 = por %p113, %p114
      %s116 = ssub.s32 %s24, %s31
      %s117 = ssub.s32 %s23, %s35
      %s118 = sor.u32 %s116, %s117
      %p119 = scmp.eq.s32.totalorder %s118, 0
      %s121 = sadd.s32 %s120, 1
      %s122 = scalar_select %p119, %s120, %s121
      %p125 = pneg %p119
      %p126 = scmp.eq.s32.totalorder %s16, 1
      %p127 = por %p125, %p126
      %p128 = scmp.ne.s32.totalorder %s120, %s123
      %p129 = scmp.eq.s32.totalorder %s16, 0
      %p130 = por %p128, %p129
      %p131 = scmp.ne.s32.totalorder %s120, %s123
      %p132 = scmp.eq.s32.totalorder %s21, 1
      %p133 = por %p131, %p132
      %p134 = scmp.ne.s32.totalorder %s123, %s124
      %p135 = scmp.eq.s32.totalorder %s21, 0
      %p136 = por %p134, %p135
      %p137 = scmp.ne.s32.totalorder %s123, %s124
      %p138 = scmp.eq.s32.totalorder %s22, 1
      %p139 = por %p137, %p138
      %p141 = scmp.ne.s32.totalorder %s124, %s140
      %p142 = scmp.eq.s32.totalorder %s22, 0
      %p143 = por %p141, %p142
      %p144 = scmp.le.s32.totalorder 1, %s16
      %p145 = scmp.lt.s32.totalorder %s16, 3
      %p146 = pnand %p144, %p145
      %p147 = pneg %p146
      // Predicated region
      $region9: #{tpu_custom_call.1} parent=5 // pred_check
        _
      $region10: #{tpu_custom_call.1} parent=5 // pred_check_branch
        %149 = sbr.rel (%p146) target = $region12
      $region11: #{tpu_custom_call.1} parent=5 // pred_region
        %s150 = ssub.s32 %s16, 1
        // Predicated region
        $region13: #{tpu_custom_call.1} parent=11 // pred_check
          %p151 = pneg %p82
        $region14: #{tpu_custom_call.1} parent=11 // pred_check_branch
          %153 = sbr.rel (%p151) target = $region16
        $region15: #{tpu_custom_call.1} parent=11 // pred_region
          %s154 = smul.u32 8, %s25
          %s156 = ssub.s32 128, 128
          %157 = vsyncadd [#allocation6], %s156
          %s158 = smul.addr %s154, 16
          %s159 = scalar_lea.hbm %s1, %s158
          %s160 = sshll.u32 [#allocation5], 4
          %s161 = int_to_ptr.vmem [resolvable:$true] %s160
          %166 = dma.hbm_to_vmem [thread:$0]  %s159, 128, %s161, [#allocation6], 16, 16, 1
        $region16: #{tpu_custom_call.1} parent=11 // pred_fallthru
          _
        // Predicated region
        $region17: #{tpu_custom_call.1} parent=11 // pred_check
          %p167 = pneg %p108
        $region18: #{tpu_custom_call.1} parent=11 // pred_check_branch
          %169 = sbr.rel (%p167) target = $region20
        $region19: #{tpu_custom_call.1} parent=11 // pred_region
          %s170 = smul.u32 8, %s25
          %s172 = ssub.s32 128, 128
          %173 = vsyncadd [#allocation6], %s172
          %s174 = smul.addr %s170, 16
          %s175 = scalar_lea.hbm %s2, %s174
          %s176 = sshll.u32 [#allocation7], 4
          %s177 = int_to_ptr.vmem [resolvable:$true] %s176
          %182 = dma.hbm_to_vmem [thread:$0]  %s175, 128, %s177, [#allocation6], 16, 16, 1
        $region20: #{tpu_custom_call.1} parent=11 // pred_fallthru
          _
      $region12: #{tpu_custom_call.1} parent=5 // pred_fallthru
        _
      %p183 = scmp.lt.s32.totalorder %s16, 2
      // Predicated region
      $region21: #{tpu_custom_call.1} parent=5 // pred_check
        %p184 = pneg %p183
      $region22: #{tpu_custom_call.1} parent=5 // pred_check_branch
        %186 = sbr.rel (%p184) target = $region24
      $region23: #{tpu_custom_call.1} parent=5 // pred_region
        // Predicated region
        $region25: #{tpu_custom_call.1} parent=23 // pred_check
          %p187 = pneg %p50
        $region26: #{tpu_custom_call.1} parent=23 // pred_check_branch
          %189 = sbr.rel (%p187) target = $region28
        $region27: #{tpu_custom_call.1} parent=23 // pred_region
          %s190 = sand.u32 %s40, 1
          %s191 = scalar_lea.sflag [#allocation3], %s190
          %s192 = sand.u32 %s40, 1
          %s193 = smul.addr %s192, 16
          %s194 = scalar_lea.vmem [#allocation2], %s193
          %s195 = smul.u32 8, %s23
          %s197 = ssub.s32 256, 256
          %198 = vsyncadd %s191, %s197
          %s199 = smul.addr %s24, 8
          %s200 = sadd.s32 %s195, %s199
          %s201 = smul.addr %s200, 32
          %s202 = scalar_lea.hbm %s0, %s201
          %s203 = sshll.u32 %s194, 4
          %s204 = int_to_ptr.vmem [resolvable:$true] %s203
          %209 = dma.hbm_to_vmem [thread:$0]  %s202, 256, %s204, %s191, 32, 32, 2
        $region28: #{tpu_custom_call.1} parent=23 // pred_fallthru
          _
      $region24: #{tpu_custom_call.1} parent=5 // pred_fallthru
        _
      %p210 = scmp.le.s32.totalorder 1, %s16
      %p211 = scmp.lt.s32.totalorder %s16, 3
      %p212 = pnand %p210, %p211
      %p213 = pneg %p212
      // Predicated region
      $region29: #{tpu_custom_call.1} parent=5 // pred_check
        _
      $region30: #{tpu_custom_call.1} parent=5 // pred_check_branch
        %215 = sbr.rel (%p212) target = $region32
      $region31: #{tpu_custom_call.1} parent=5 // pred_region
        %s216 = ssub.s32 %s16, 1
        %s217 = sand.u32 %s43, 1
        %s218 = scalar_lea.sflag [#allocation3], %s217
        %s219 = sand.u32 %s43, 1
        %s220 = smul.addr %s219, 16
        %s221 = scalar_lea.vmem [#allocation2], %s220
        // Predicated region
        $region33: #{tpu_custom_call.1} parent=31 // pred_check
          %p222 = pneg %p56
        $region34: #{tpu_custom_call.1} parent=31 // pred_check_branch
          %224 = sbr.rel (%p222) target = $region36
        $region35: #{tpu_custom_call.1} parent=31 // pred_region
          %225 = dma.done %s218, 256
        $region36: #{tpu_custom_call.1} parent=31 // pred_fallthru
          _
        // Predicated region
        $region37: #{tpu_custom_call.1} parent=31 // pred_check
          %p226 = pneg %p82
        $region38: #{tpu_custom_call.1} parent=31 // pred_check_branch
          %228 = sbr.rel (%p226) target = $region40
        $region39: #{tpu_custom_call.1} parent=31 // pred_region
          %229 = dma.done [#allocation6], 128
        $region40: #{tpu_custom_call.1} parent=31 // pred_fallthru
          _
        // Predicated region
        $region41: #{tpu_custom_call.1} parent=31 // pred_check
          %p230 = pneg %p108
        $region42: #{tpu_custom_call.1} parent=31 // pred_check_branch
          %232 = sbr.rel (%p230) target = $region44
        $region43: #{tpu_custom_call.1} parent=31 // pred_region
          %233 = dma.done [#allocation6], 128
        $region44: #{tpu_custom_call.1} parent=31 // pred_fallthru
          _
        %s234 = sand.u32 %s43, 1
        %s235 = scalar_lea.sflag [#allocation3], %s234
        %s236 = sand.u32 %s43, 1
        %s237 = smul.addr %s236, 16
        %s238 = scalar_lea.vmem [#allocation2], %s237
        %p239 = pneg %p56
        %p240 = pneg %p53
        %p241 = pneg %p82
        %p242 = pneg %p79
        %p243 = pneg %p108
        %p244 = pneg %p105
        %p245 = pneg %p136
        %p246 = pneg %p133
        %s247 = sand.u32 %s123, 1
        %s248 = scalar_lea.sflag [#allocation4], %s247
        %s249 = sand.u32 %s123, 1
        %s250 = smul.addr %s249, 16
        %s251 = scalar_lea.vmem [#allocation8], %s250
        %s252 = smul.u32 8, %s25
        %s253 = smul.u32 8, %s25
        %s254 = smul.u32 8, %s25
        %s255 = smul.u32 8, %s25
        %v256 = vld [vmem:[%s221] sm:$0x3]
        %v257 = vld [vmem:[%s221 + $0x2] sm:$0x3]
        %v258 = vld [vmem:[%s221 + $0x4] sm:$0x3]
        %v259 = vld [vmem:[%s221 + $0x6] sm:$0x3]
        %v260 = vld [vmem:[%s221 + $0x8] sm:$0x3]
        %v261 = vld [vmem:[%s221 + $0xa] sm:$0x3]
        %v262 = vld [vmem:[%s221 + $0xc] sm:$0x3]
        %v263 = vld [vmem:[%s221 + $0xe] sm:$0x3]
        %v264 = vld [vmem:[#allocation5] sm:$0x1]
        %v265 = vld [vmem:[#allocation5 + $0x1] sm:$0x1]
        %v266 = vld [vmem:[#allocation5 + $0x2] sm:$0x1]
        %v267 = vld [vmem:[#allocation5 + $0x3] sm:$0x1]
        %v268 = vld [vmem:[#allocation5 + $0x4] sm:$0x1]
        %v269 = vld [vmem:[#allocation5 + $0x5] sm:$0x1]
        %v270 = vld [vmem:[#allocation5 + $0x6] sm:$0x1]
        %v271 = vld [vmem:[#allocation5 + $0x7] sm:$0x1]
        %v272 = vld [vmem:[#allocation7] sm:$0x1]
        %v273 = vld [vmem:[#allocation7 + $0x1] sm:$0x1]
        %v274 = vld [vmem:[#allocation7 + $0x2] sm:$0x1]
        %v275 = vld [vmem:[#allocation7 + $0x3] sm:$0x1]
        %v276 = vld [vmem:[#allocation7 + $0x4] sm:$0x1]
        %v277 = vld [vmem:[#allocation7 + $0x5] sm:$0x1]
        %v278 = vld [vmem:[#allocation7 + $0x6] sm:$0x1]
        %v279 = vld [vmem:[#allocation7 + $0x7] sm:$0x1]
        %v280 = vlaneseq
        %v281 = vand.u32 %v280, 127
        %vm282 = vcmp.lt.s32.totalorder %v281, 0
        %v283 = vsub.s32 0, %v281
        %v284 = vsel %vm282, %v283, %v281
        %v285 = vshrl.u32 %v284, 1
        %v286 = vand.u32 %v284, 1
        %v287 = vsub.s32 0, %v286
        %v288 = vsel %vm282, %v287, %v286
        %vm289 = vcmp.ne.s32.totalorder %v288, 0
        %vm290 = vcmp.lt.s32.totalorder %v288, 0
        %vm291 = vmand %vm290, %vm289
        %v292 = vadd.s32 %v288, 2
        %v293 = vsel %vm291, %v292, %v288
        %vm294 = vcmp.eq.s32.totalorder %v293, 0
        %vm295 = vcmask 1047808
        %296 = vrot.lane.b32.xlu0 %v256, 32
        %v297 = vpop.permute.xlu0 %296
        %v298 = vsel %vm295, %v297, %v256
        %299 = vrot.lane.b32.xlu0 %v257, 32
        %v300 = vpop.permute.xlu0 %299
        %v301 = vsel %vm295, %v300, %v257
        %302 = vrot.lane.b32.xlu0 %v258, 32
        %v303 = vpop.permute.xlu0 %302
        %v304 = vsel %vm295, %v303, %v258
        %305 = vrot.lane.b32.xlu0 %v259, 32
        %v306 = vpop.permute.xlu0 %305
        %v307 = vsel %vm295, %v306, %v259
        %308 = vrot.lane.b32.xlu0 %v260, 32
        %v309 = vpop.permute.xlu0 %308
        %v310 = vsel %vm295, %v309, %v260
        %311 = vrot.lane.b32.xlu0 %v261, 32
        %v312 = vpop.permute.xlu0 %311
        %v313 = vsel %vm295, %v312, %v261
        %314 = vrot.lane.b32.xlu0 %v262, 32
        %v315 = vpop.permute.xlu0 %314
        %v316 = vsel %vm295, %v315, %v262
        %317 = vrot.lane.b32.xlu0 %v263, 32
        %v318 = vpop.permute.xlu0 %317
        %v319 = vsel %vm295, %v318, %v263
        %320 = vrot.lane.b32.xlu0 %v298, 32
        %v321 = vpop.permute.xlu0 %320
        %322 = vrot.lane.b32.xlu0 %v301, 32
        %v323 = vpop.permute.xlu0 %322
        %324 = vrot.lane.b32.xlu0 %v304, 32
        %v325 = vpop.permute.xlu0 %324
        %326 = vrot.lane.b32.xlu0 %v307, 32
        %v327 = vpop.permute.xlu0 %326
        %328 = vrot.lane.b32.xlu0 %v310, 32
        %v329 = vpop.permute.xlu0 %328
        %330 = vrot.lane.b32.xlu0 %v313, 32
        %v331 = vpop.permute.xlu0 %330
        %332 = vrot.lane.b32.xlu0 %v316, 32
        %v333 = vpop.permute.xlu0 %332
        %334 = vrot.lane.b32.xlu0 %v319, 32
        %v335 = vpop.permute.xlu0 %334
        %v336 = vsel %vm295, %v321, %v256
        %v337 = vsel %vm295, %v323, %v257
        %v338 = vsel %vm295, %v325, %v258
        %v339 = vsel %vm295, %v327, %v259
        %v340 = vsel %vm295, %v329, %v260
        %v341 = vsel %vm295, %v331, %v261
        %v342 = vsel %vm295, %v333, %v262
        %v343 = vsel %vm295, %v335, %v263
        %352 = vrot.lane.b32.xlu0 %v336, 127
        %v353 = vpop.permute.xlu0 %352
        %354 = vrot.lane.b32.xlu0 %v337, 127
        %v355 = vpop.permute.xlu0 %354
        %356 = vrot.lane.b32.xlu0 %v338, 127
        %v357 = vpop.permute.xlu0 %356
        %358 = vrot.lane.b32.xlu0 %v339, 127
        %v359 = vpop.permute.xlu0 %358
        %360 = vrot.lane.b32.xlu0 %v340, 127
        %v361 = vpop.permute.xlu0 %360
        %362 = vrot.lane.b32.xlu0 %v341, 127
        %v363 = vpop.permute.xlu0 %362
        %364 = vrot.lane.b32.xlu0 %v342, 127
        %v365 = vpop.permute.xlu0 %364
        %366 = vrot.lane.b32.xlu0 %v343, 127
        %v367 = vpop.permute.xlu0 %366
        %376 = vrot.lane.b32.xlu0 %v336, 97
        %v377 = vpop.permute.xlu0 %376
        %378 = vrot.lane.b32.xlu0 %v337, 97
        %v379 = vpop.permute.xlu0 %378
        %380 = vrot.lane.b32.xlu0 %v338, 97
        %v381 = vpop.permute.xlu0 %380
        %382 = vrot.lane.b32.xlu0 %v339, 97
        %v383 = vpop.permute.xlu0 %382
        %384 = vrot.lane.b32.xlu0 %v340, 97
        %v385 = vpop.permute.xlu0 %384
        %386 = vrot.lane.b32.xlu0 %v341, 97
        %v387 = vpop.permute.xlu0 %386
        %388 = vrot.lane.b32.xlu0 %v342, 97
        %v389 = vpop.permute.xlu0 %388
        %390 = vrot.lane.b32.xlu0 %v343, 97
        %v391 = vpop.permute.xlu0 %390
        %v400 = vsel %vm294, %v353, %v377
        %v401 = vsel %vm294, %v355, %v379
        %v402 = vsel %vm294, %v357, %v381
        %v403 = vsel %vm294, %v359, %v383
        %v404 = vsel %vm294, %v361, %v385
        %v405 = vsel %vm294, %v363, %v387
        %v406 = vsel %vm294, %v365, %v389
        %v407 = vsel %vm294, %v367, %v391
        %v416 = vlaneseq
        %v417 = vshrl.u32 %v416, 7
        %v418 = vsub.s32 0, %v417
        %v419 = vrot.slane %v264, %v418
        %v420 = vlaneseq
        %v421 = vshrl.u32 %v420, 7
        %v422 = vsub.s32 0, %v421
        %v423 = vrot.slane %v265, %v422
        %v424 = vlaneseq
        %v425 = vshrl.u32 %v424, 7
        %v426 = vsub.s32 0, %v425
        %v427 = vrot.slane %v266, %v426
        %v428 = vlaneseq
        %v429 = vshrl.u32 %v428, 7
        %v430 = vsub.s32 0, %v429
        %v431 = vrot.slane %v267, %v430
        %v432 = vlaneseq
        %v433 = vshrl.u32 %v432, 7
        %v434 = vsub.s32 0, %v433
        %v435 = vrot.slane %v268, %v434
        %v436 = vlaneseq
        %v437 = vshrl.u32 %v436, 7
        %v438 = vsub.s32 0, %v437
        %v439 = vrot.slane %v269, %v438
        %v440 = vlaneseq
        %v441 = vshrl.u32 %v440, 7
        %v442 = vsub.s32 0, %v441
        %v443 = vrot.slane %v270, %v442
        %v444 = vlaneseq
        %v445 = vshrl.u32 %v444, 7
        %v446 = vsub.s32 0, %v445
        %v447 = vrot.slane %v271, %v446
        %v456 = vmul.f32 %v256, %v419
        %v457 = vmul.f32 %v257, %v423
        %v458 = vmul.f32 %v258, %v427
        %v459 = vmul.f32 %v259, %v431
        %v460 = vmul.f32 %v260, %v435
        %v461 = vmul.f32 %v261, %v439
        %v462 = vmul.f32 %v262, %v443
        %v463 = vmul.f32 %v263, %v447
        %v472 = vlaneseq
        %v473 = vshrl.u32 %v472, 7
        %v474 = vsub.s32 0, %v473
        %v475 = vrot.slane %v272, %v474
        %v476 = vlaneseq
        %v477 = vshrl.u32 %v476, 7
        %v478 = vsub.s32 0, %v477
        %v479 = vrot.slane %v273, %v478
        %v480 = vlaneseq
        %v481 = vshrl.u32 %v480, 7
        %v482 = vsub.s32 0, %v481
        %v483 = vrot.slane %v274, %v482
        %v484 = vlaneseq
        %v485 = vshrl.u32 %v484, 7
        %v486 = vsub.s32 0, %v485
        %v487 = vrot.slane %v275, %v486
        %v488 = vlaneseq
        %v489 = vshrl.u32 %v488, 7
        %v490 = vsub.s32 0, %v489
        %v491 = vrot.slane %v276, %v490
        %v492 = vlaneseq
        %v493 = vshrl.u32 %v492, 7
        %v494 = vsub.s32 0, %v493
        %v495 = vrot.slane %v277, %v494
        %v496 = vlaneseq
        %v497 = vshrl.u32 %v496, 7
        %v498 = vsub.s32 0, %v497
        %v499 = vrot.slane %v278, %v498
        %v500 = vlaneseq
        %v501 = vshrl.u32 %v500, 7
        %v502 = vsub.s32 0, %v501
        %v503 = vrot.slane %v279, %v502
        %v512 = vmul.f32 %v400, %v475
        %v513 = vmul.f32 %v401, %v479
        %v514 = vmul.f32 %v402, %v483
        %v515 = vmul.f32 %v403, %v487
        %v516 = vmul.f32 %v404, %v491
        %v517 = vmul.f32 %v405, %v495
        %v518 = vmul.f32 %v406, %v499
        %v519 = vmul.f32 %v407, %v503
        %v520 = vadd.f32 %v456, %v512
        %v521 = vadd.f32 %v457, %v513
        %v522 = vadd.f32 %v458, %v514
        %v523 = vadd.f32 %v459, %v515
        %v524 = vadd.f32 %v460, %v516
        %v525 = vadd.f32 %v461, %v517
        %v526 = vadd.f32 %v462, %v518
        %v527 = vadd.f32 %v463, %v519
        %vm528 = vcmask 254976
        %529 = vst.msk [vmem:[%s251] sm:$0x3] %vm528, %v520
        %530 = vst.msk [vmem:[%s251 + $0x2] sm:$0x3] %vm528, %v521
        %531 = vst.msk [vmem:[%s251 + $0x4] sm:$0x3] %vm528, %v522
        %532 = vst.msk [vmem:[%s251 + $0x6] sm:$0x3] %vm528, %v523
        %533 = vst.msk [vmem:[%s251 + $0x8] sm:$0x3] %vm528, %v524
        %534 = vst.msk [vmem:[%s251 + $0xa] sm:$0x3] %vm528, %v525
        %535 = vst.msk [vmem:[%s251 + $0xc] sm:$0x3] %vm528, %v526
        %536 = vst.msk [vmem:[%s251 + $0xe] sm:$0x3] %vm528, %v527
        %s537 = sand.u32 %s123, 1
        %s538 = scalar_lea.sflag [#allocation4], %s537
        %s539 = sand.u32 %s123, 1
        %s540 = smul.addr %s539, 16
        %s541 = scalar_lea.vmem [#allocation8], %s540
        // Predicated region
        $region45: #{tpu_custom_call.1} parent=31 // pred_check
          %p542 = pneg %p133
        $region46: #{tpu_custom_call.1} parent=31 // pred_check_branch
          %544 = sbr.rel (%p542) target = $region48
        $region47: #{tpu_custom_call.1} parent=31 // pred_region
          %s545 = smul.u32 8, %s25
          %s547 = ssub.s32 256, 256
          %548 = vsyncadd %s538, %s547
          %s549 = smul.addr %s26, 8
          %s550 = sadd.s32 %s545, %s549
          %s551 = smul.addr %s550, 32
          %s552 = scalar_lea.hbm %s3, %s551
          %s553 = sshll.u32 %s541, 4
          %s554 = int_to_ptr.vmem [resolvable:$true] %s553
          %559 = dma.vmem_to_hbm [thread:$0]  %s554, 256, %s552, %s538, 32, 32, 2
        $region48: #{tpu_custom_call.1} parent=31 // pred_fallthru
          _
      $region32: #{tpu_custom_call.1} parent=5 // pred_fallthru
        _
      %p560 = scmp.le.s32.totalorder 2, %s16
      // Predicated region
      $region49: #{tpu_custom_call.1} parent=5 // pred_check
        %p561 = pneg %p560
      $region50: #{tpu_custom_call.1} parent=5 // pred_check_branch
        %563 = sbr.rel (%p561) target = $region52
      $region51: #{tpu_custom_call.1} parent=5 // pred_region
        %s564 = ssub.s32 %s16, 2
        // Predicated region
        $region53: #{tpu_custom_call.1} parent=51 // pred_check
          %p565 = pneg %p139
        $region54: #{tpu_custom_call.1} parent=51 // pred_check_branch
          %567 = sbr.rel (%p565) target = $region56
        $region55: #{tpu_custom_call.1} parent=51 // pred_region
          %s568 = sand.u32 %s124, 1
          %s569 = scalar_lea.sflag [#allocation4], %s568
          %s570 = sand.u32 %s124, 1
          %s571 = smul.addr %s570, 16
          %s572 = scalar_lea.vmem [#allocation8], %s571
          %573 = dma.done %s569, 256
        $region56: #{tpu_custom_call.1} parent=51 // pred_fallthru
          _
      $region52: #{tpu_custom_call.1} parent=5 // pred_fallthru
        _
    $region6: #{tpu_custom_call.1} parent=1 // loop_footer
      %s20 = sadd.s32 1, %s16
    $region7: #{tpu_custom_call.1} parent=1 // loop_footer_branch
      %15 = sbr.rel target = $region3
    $region8: #{tpu_custom_call.1} parent=1 // loop_exit
      _
    %574 = vsyncpa [#allocation3], 1
    %s575 = scalar_lea.sflag [#allocation3], 1
    %576 = vsyncpa %s575, 1
    %577 = vsyncpa [#allocation6], 1
    %578 = vsyncpa [#allocation4], 1
    %s579 = scalar_lea.sflag [#allocation4], 1
    %580 = vsyncpa %s579, 1

</llo_original>
